<compile_context>
chip_gen: v6e
topology: v6e:2x2x1
jax: 0.10.0
libtpu: 0.0.40
codegen_flags: <defaults>
</compile_context>

<pallas_src>
import functools

import jax
import jax.numpy as jnp
from jax.experimental import pallas as pl
from jax.experimental.pallas import tpu as pltpu

LANE = 128
SUBLANE = 8
MAX_ROW_TILE = 1024   # 1024 x 128 f32 = 512 KiB per input buffer
NUM_SPLITS = 2        # shard the "parallel" grid axis across TensorCores (v7x)


def _soften_loss_kernel(x_ref, o_ref, *, a, steps, row_tile, rows_full, rem,
                        need_mask):
    c = pl.program_id(0)   # core-split axis ("parallel")
    s = pl.program_id(1)   # reduction axis   ("arbitrary")

    # o_ref is the per-core vector accumulator (same block for every s).
    @pl.when(s == 0)
    def _():
        o_ref[...] = jnp.zeros_like(o_ref)

    x = x_ref[...].astype(jnp.float32)      # cast in-kernel (no-op for f32)
    d = x - jnp.float32(a)

    if need_mask:
        # Logical (unclamped) block index; padded / overhanging / duplicated
        # rows are zeroed out *before* squaring, so they contribute exactly 0.
        block_idx = c * steps + s
        grow = block_idx * row_tile + jax.lax.broadcasted_iota(
            jnp.int32, (row_tile, LANE), 0)
        mask = grow < rows_full
        if rem:
            lane = jax.lax.broadcasted_iota(jnp.int32, (row_tile, LANE), 1)
            mask = mask | ((grow == rows_full) & (lane < rem))
        d = jnp.where(mask, d, 0.0)

    o_ref[...] += d * d


def soften_loss(x, label_num=2):
    """Pallas equivalent of SoftenLoss.forward: sum((x - 1/label_num)**2)."""
    a = 1.0 / label_num

    flat = x.reshape(-1)              # native dtype; no wrapper upcast
    n = flat.shape[0]

    # Pad only up to one (8, 128) tile (<= 1023 elements, ~4 KiB) so the slab
    # is (rows, 128) with rows % 8 == 0.  Padded elements are masked in-kernel.
    chunk = SUBLANE * LANE
    n_pad = (-n) % chunk
    if n_pad:
        flat = jnp.pad(flat, (0, n_pad))
    rows = flat.shape[0] // LANE
    slab = flat.reshape(rows, LANE)

    row_tile = min(MAX_ROW_TILE, rows)            # multiple of 8
    num_blocks = pl.cdiv(rows, row_tile)
    splits = min(NUM_SPLITS, num_blocks)
    steps = pl.cdiv(num_blocks, splits)

    rows_full = n // LANE
    rem = n % LANE
    # Mask iff any logically-covered element is beyond the true element count
    # (tail padding, partial last block, or duplicated blocks on a core).
    need_mask = (splits * steps * row_tile * LANE) != n

    if splits * steps > num_blocks:
        # A core may be handed duplicate (clamped) blocks; they are fully
        # masked out in-kernel, so re-reading the last valid block is safe.
        def in_index(c, s):
            return (jnp.minimum(c * steps + s, num_blocks - 1), 0)
    else:
        def in_index(c, s):
            return (c * steps + s, 0)

    kernel = functools.partial(
        _soften_loss_kernel, a=a, steps=steps, row_tile=row_tile,
        rows_full=rows_full, rem=rem, need_mask=need_mask)

    partials = pl.pallas_call(
        kernel,
        out_shape=jax.ShapeDtypeStruct((splits * row_tile, LANE), jnp.float32),
        grid_spec=pltpu.PrefetchScalarGridSpec(
            num_scalar_prefetch=0,
            grid=(splits, steps),
            in_specs=[pl.BlockSpec((row_tile, LANE), in_index)],
            out_specs=pl.BlockSpec((row_tile, LANE), lambda c, s: (c, 0)),
        ),
        compiler_params=pltpu.CompilerParams(
            dimension_semantics=("parallel", "arbitrary"),
        ),
    )(slab)

    # Tiny final reduce of the per-lane partial sums (<= 1 MiB) in plain XLA.
    return jnp.sum(partials)


if __name__ == "__main__":
    key = jax.random.PRNGKey(0)

    checks = [
        ((2, 4, 16, 16), 2),    # evenly tiled path (no masking)
        ((2, 3, 7, 5), 3),      # ragged tail -> in-kernel masking
        ((3, 8, 128, 128), 2),  # multi-block + core split with clamped dup block
    ]
    for idx, (shape, label_num) in enumerate(checks):
        k = jax.random.fold_in(key, idx)
        x = jax.random.normal(k, shape, dtype=jnp.float32)
        result = jax.block_until_ready(soften_loss(x, label_num=label_num))
        ref = jnp.sum((x - 1.0 / label_num) ** 2)
        assert jnp.allclose(result, ref, rtol=1e-5, atol=1e-5), (shape, result, ref)

    print("KERNEL_OK")
</pallas_src>

<mosaic_0001>
module attributes {stable_mosaic.version = 11 : i64} {
  func.func @_soften_loss_kernel(%arg0: i32, %arg1: i32, %arg2: memref<16x128xf32, #tpu.memory_space<vmem>>, %arg3: memref<16x128xf32, #tpu.memory_space<vmem>>) attributes {dimension_semantics = [#tpu.dimension_semantics<parallel>, #tpu.dimension_semantics<arbitrary>], iteration_bounds = array<i64: 1, 1>, scalar_prefetch = 0 : i64, scratch_operands = 0 : i64, tpu.core_type = #tpu.core_type<tc>, window_params = [{transform_indices = @transform_0, window_bounds = array<i64: 16, 128>}, {transform_indices = @transform_1, window_bounds = array<i64: 16, 128>}]} {
    %c0_i32 = arith.constant 0 : i32
    %0 = arith.cmpi eq, %arg1, %c0_i32 : i32
    %1 = arith.extui %0 : i1 to i32
    %c0_i32_0 = arith.constant 0 : i32
    %2 = arith.cmpi ne, %1, %c0_i32_0 : i32
    scf.if %2 {
      %cst_6 = arith.constant 0.000000e+00 : f32
      %10 = vector.broadcast %cst_6 : f32 to vector<16x128xf32>
      %c0_7 = arith.constant 0 : index
      %c0_8 = arith.constant 0 : index
      %11 = vector.load %arg3[%c0_7, %c0_8] : memref<16x128xf32, #tpu.memory_space<vmem>>, vector<16x128xf32>
      tpu.vector_store %arg3[%c0_7, %c0_8], %10 {strides = array<i32>} : memref<16x128xf32, #tpu.memory_space<vmem>>, vector<16x128xf32>,
    } else {
    }
    %c0 = arith.constant 0 : index
    %c0_1 = arith.constant 0 : index
    %3 = vector.load %arg2[%c0, %c0_1] : memref<16x128xf32, #tpu.memory_space<vmem>>, vector<16x128xf32>
    %cst = arith.constant 5.000000e-01 : f32
    %4 = vector.broadcast %cst : f32 to vector<16x128xf32>
    %5 = arith.subf %3, %4 : vector<16x128xf32>
    %c0_2 = arith.constant 0 : index
    %c0_3 = arith.constant 0 : index
    %6 = vector.load %arg3[%c0_2, %c0_3] : memref<16x128xf32, #tpu.memory_space<vmem>>, vector<16x128xf32>
    %7 = arith.mulf %5, %5 : vector<16x128xf32>
    %8 = arith.addf %6, %7 : vector<16x128xf32>
    %c0_4 = arith.constant 0 : index
    %c0_5 = arith.constant 0 : index
    %9 = vector.load %arg3[%c0_4, %c0_5] : memref<16x128xf32, #tpu.memory_space<vmem>>, vector<16x128xf32>
    tpu.vector_store %arg3[%c0_4, %c0_5], %8 {strides = array<i32>} : memref<16x128xf32, #tpu.memory_space<vmem>>, vector<16x128xf32>,
    return
  }
  func.func @transform_0(%arg0: i32, %arg1: i32) -> (i32, i32) {
    %c1_i32 = arith.constant 1 : i32
    %0 = arith.muli %arg0, %c1_i32 : i32
    %1 = arith.addi %0, %arg1 : i32
    %c0_i32 = arith.constant 0 : i32
    %c0_i32_0 = arith.constant 0 : i32
    return %1, %c0_i32 : i32, i32
  }
  func.func @transform_1(%arg0: i32, %arg1: i32) -> (i32, i32) {
    %c0_i32 = arith.constant 0 : i32
    %c0_i32_0 = arith.constant 0 : i32
    return %arg0, %c0_i32 : i32, i32
  }
}

</mosaic_0001>

<llo_original>
// kernel: tpu_custom_call.1
$region0: #{tpu_custom_call.1}
  #allocation0 [shape = 'u32[]', space=smem, size = 0x4, offset = 0x4, fixed_abs, tag = 'smem constant byte address 0x4 - core index']
  #allocation1 [shape = 'u32[144,128]{1,0:T(1,128)}', space=vmem, size = 0x12000, scoped, tag = 'internal scratch']
  %s0 = inlined_call_operand.hbm [shape: f32[16,128], index: 0, kind: input, shape index: {}]
  %s1 = inlined_call_operand.hbm [shape: f32[16,128], index: 1, kind: output, shape index: {}]
  %s2 = sld [smem:[#allocation0]]
  $region22: #{tpu_custom_call.1} parent=0
    _
  %s4 = ssub.s32 1, %s2
  %s5 = scalar_select 0, %s4, %s2
  $region1: #{tpu_custom_call.1} parent=0
    #allocation2 [shape = 'u8[8192]{0}', space=vmem, size = 0x2000, scoped, tag = 'input window, operand 0, single buffered']
    #allocation3 [shape = 's32[1]{0}', space=sflag, size = 0x4, scoped, tag = 'scoped memory for tpu_custom_call.1']
    #allocation4 [shape = 's32[1]{0}', space=sflag, size = 0x4, scoped, tag = 'scoped memory for tpu_custom_call.1']
    #allocation5 [shape = 'u8[8192]{0}', space=vmem, size = 0x2000, scoped, tag = 'output window, operand 0, single buffered']
    %6 = vsyncpa [#allocation3], 0
    %7 = vsyncpa [#allocation4], 0
    // Predicated region
    $region2: #{tpu_custom_call.1} parent=1 // pred_check
      _
    $region3: #{tpu_custom_call.1} parent=1 // pred_check_branch
      %9 = sbr.rel (0) target = $region5
    $region4: #{tpu_custom_call.1} parent=1 // pred_region
      %s10 = sadd.s32 0, 0
      %s11 = smul.u32 2, %s10
      %s13 = ssub.s32 256, 256
      %14 = vsyncadd [#allocation3], %s13
      %s15 = smul.addr %s11, 128
      %s16 = scalar_lea.hbm %s0, %s15
      %s17 = sshll.u32 [#allocation2], 4
      %s18 = int_to_ptr.vmem [resolvable:$true] %s17
      %23 = dma.hbm_to_vmem [thread:$0]  %s16, 256, %s18, [#allocation3], 128, 128, 8
    $region5: #{tpu_custom_call.1} parent=1 // pred_fallthru
      _
    // Predicated region
    $region6: #{tpu_custom_call.1} parent=1 // pred_check
      _
    $region7: #{tpu_custom_call.1} parent=1 // pred_check_branch
      %25 = sbr.rel (0) target = $region9
    $region8: #{tpu_custom_call.1} parent=1 // pred_region
      %26 = dma.done [#allocation3], 256
    $region9: #{tpu_custom_call.1} parent=1 // pred_fallthru
      _
    %s27 = sadd.s32 0, 0
    %s28 = smul.u32 2, %s27
    %p29 = scmp.eq.s32.totalorder 0, 0
    // Predicated region
    $region10: #{tpu_custom_call.1} parent=1 // pred_check
      %p30 = pneg %p29
    $region11: #{tpu_custom_call.1} parent=1 // pred_check_branch
      %32 = sbr.rel (%p30) target = $region13
    $region12: #{tpu_custom_call.1} parent=1 // pred_region
      %33 = vst [vmem:[#allocation5] sm:$0xff] 0.0
      %34 = vst [vmem:[#allocation5 + $0x8] sm:$0xff] 0.0
    $region13: #{tpu_custom_call.1} parent=1 // pred_fallthru
      _
    %v35 = vld [vmem:[#allocation2] sm:$0xff]
    %v36 = vld [vmem:[#allocation2 + $0x8] sm:$0xff]
    %v37 = vsub.f32 %v35, 0.5
    %v38 = vsub.f32 %v36, 0.5
    %v39 = vld [vmem:[#allocation5] sm:$0xff]
    %v40 = vld [vmem:[#allocation5 + $0x8] sm:$0xff]
    %v41 = vmul.f32 %v37, %v37
    %v42 = vmul.f32 %v38, %v38
    %v43 = vadd.f32 %v39, %v41
    %v44 = vadd.f32 %v40, %v42
    %45 = vst [vmem:[#allocation5] sm:$0xff] %v43
    %46 = vst [vmem:[#allocation5 + $0x8] sm:$0xff] %v44
    // Predicated region
    $region14: #{tpu_custom_call.1} parent=1 // pred_check
      _
    $region15: #{tpu_custom_call.1} parent=1 // pred_check_branch
      %48 = sbr.rel (0) target = $region17
    $region16: #{tpu_custom_call.1} parent=1 // pred_region
      %s50 = ssub.s32 256, 256
      %51 = vsyncadd [#allocation4], %s50
      %s52 = sshll.u32 [#allocation5], 4
      %s53 = int_to_ptr.vmem [resolvable:$true] %s52
      %58 = dma.vmem_to_hbm [thread:$0]  %s53, 256, %s1, [#allocation4], 128, 128, 8
    $region17: #{tpu_custom_call.1} parent=1 // pred_fallthru
      _
    // Predicated region
    $region18: #{tpu_custom_call.1} parent=1 // pred_check
      _
    $region19: #{tpu_custom_call.1} parent=1 // pred_check_branch
      %60 = sbr.rel (0) target = $region21
    $region20: #{tpu_custom_call.1} parent=1 // pred_region
      %61 = dma.done [#allocation4], 256
    $region21: #{tpu_custom_call.1} parent=1 // pred_fallthru
      _
    %62 = vsyncpa [#allocation3], 1
    %63 = vsyncpa [#allocation4], 1

</llo_original>
